<compile_context>
chip_gen: v7x
topology: tpu7x:2x2x1
jax: 0.10.0
libtpu: 0.0.40
codegen_flags: <defaults>
</compile_context>

<pallas_src>
import functools

import jax
import jax.numpy as jnp
from jax import lax
from jax.experimental import pallas as pl
from jax.experimental.pallas import tpu as pltpu

_LANES = 128


def _focal_loss_kernel(x_ref, lbl_ref, out_ref, acc_ref, *,
                       num_classes, gamma, lb_smooth, ignore_index,
                       hw, s_tile, num_t, n_sp, needs_mask):
    sp = pl.program_id(1)               # parallel spatial split (v7x 2-TC)
    t = pl.program_id(2)                # sequential spatial walk (reduction)

    # Reset the dense per-cell accumulator at the start of each (nb, sp) cell.
    @pl.when(t == 0)
    def _():
        acc_ref[...] = jnp.zeros_like(acc_ref)

    x = x_ref[...]                       # (B, C, S_TILE, 128), native dtype
    lbl = lbl_ref[...].astype(jnp.int32)  # (B, S_TILE, 128), streamed narrow

    # ---- pass 1 over classes: running max + running logit sum (pure VALU). ----
    x0 = x[:, 0].astype(jnp.float32)
    m = x0
    sum_x = x0
    for c in range(1, num_classes):
        xc = x[:, c].astype(jnp.float32)
        m = jnp.maximum(m, xc)
        sum_x = sum_x + xc

    # ---- pass 2: exp / sum-exp / target selects (no iota, no one-hot). ----
    s = jnp.zeros_like(m)
    x_t = jnp.zeros_like(m)
    e_t = jnp.zeros_like(m)
    for c in range(num_classes):
        xc = x[:, c].astype(jnp.float32)
        ec = jnp.exp(xc - m)             # single exp pass (EUP)
        s = s + ec
        hit = lbl == c
        x_t = jnp.where(hit, xc, x_t)    # target logit
        e_t = jnp.where(hit, ec, e_t)    # exp(target - max), reused for p_t

    lse = m + jnp.log(s)                 # per-pixel log-sum-exp
    logs_t = x_t - lse                   # log_softmax at the target class
    sum_logs = sum_x - num_classes * lse # sum_c log_softmax

    # Focal factor only on the target term (it is 1 everywhere else).
    p_t = e_t * pl.reciprocal(s, approx=True)          # reuses e_t, no 2nd exp
    one_minus_pt = jnp.maximum(1.0 - p_t, 0.0)         # clamp before pow: no NaN
    if isinstance(gamma, int):
        diff_t = lax.integer_pow(one_minus_pt, gamma)
    else:
        diff_t = jnp.power(one_minus_pt, gamma)

    lb_pos = 1.0 - lb_smooth
    lb_neg = lb_smooth / (num_classes - 1)
    loss = -(lb_neg * (sum_logs - logs_t) + lb_pos * diff_t * logs_t)  # (B,S,128)

    if ignore_index is not None:
        loss = jnp.where(lbl == ignore_index, 0.0, loss)

    tile_loss = jnp.sum(loss, axis=0)    # (S_TILE, 128): reduce the image block

    if needs_mask:
        # Padded pixels all live in the last spatial block; only that block
        # pays for the iota + compare + select.
        is_last = jnp.logical_and(sp == n_sp - 1, t == num_t - 1)

        @pl.when(is_last)
        def _():
            row0 = (sp * num_t + t) * s_tile
            rows = row0 + lax.broadcasted_iota(jnp.int32, (s_tile, _LANES), 0)
            lanes = lax.broadcasted_iota(jnp.int32, (s_tile, _LANES), 1)
            pix = rows * _LANES + lanes
            acc_ref[...] += jnp.where(pix < hw, tile_loss, 0.0)

        @pl.when(jnp.logical_not(is_last))
        def _():
            acc_ref[...] += tile_loss
    else:
        acc_ref[...] += tile_loss

    # Only the final block of each (nb, sp) cell pays for the cross-lane reduce.
    @pl.when(t == num_t - 1)
    def _():
        col = jnp.sum(acc_ref[...], axis=0, keepdims=True)   # (1, 128)
        out_ref[...] = jnp.sum(col, axis=1, keepdims=True)   # (1, 1)


def _tiling(n, c, hw, logits_itemsize, lbl_itemsize, target_step_bytes):
    """Pick (s_tile, s_rows_padded, b_n, num_nb, n_sp, num_t)."""
    s_rows = pl.cdiv(hw, _LANES)
    bytes_per_row = (c * logits_itemsize + lbl_itemsize) * _LANES  # per image
    rows_target = max(8, target_step_bytes // bytes_per_row)

    if rows_target >= s_rows:
        # Whole image fits one spatial block: batch images per step instead,
        # but keep >= 2 image blocks when N >= 2 so megacore / v7x's 2 TCs
        # still have parallel work.
        s_tile = s_rows
        s_rows_p = s_rows
        num_blocks = 1
        max_bn = n // 2 if n >= 2 else 1
        b_n = 1
        for d in range(1, n + 1):
            if n % d == 0 and d <= max_bn and d * s_rows * bytes_per_row <= target_step_bytes:
                b_n = d
    else:
        s_tile = (rows_target // 8) * 8            # (8,128)-aligned block
        num_blocks = pl.cdiv(s_rows, s_tile)
        s_rows_p = num_blocks * s_tile
        b_n = 1

    num_nb = n // b_n
    # v7x: if there is only a single image block, split the spatial walk into
    # two parallel halves so both TensorCores get work.
    if num_nb == 1 and num_blocks >= 2 and num_blocks % 2 == 0:
        n_sp = 2
    else:
        n_sp = 1
    num_t = num_blocks // n_sp
    return s_tile, s_rows_p, b_n, num_nb, n_sp, num_t


def focal_loss_with_smoothing(logits, label, *, gamma=1, lb_smooth=0.1,
                              ignore_index=None, target_step_bytes=4 << 20):
    """Forward pass of FocalLossWithSmoothing. Returns a scalar (f32)."""
    N, C, H, W = logits.shape
    HW = H * W
    assert C >= 2, "The number of classes must be 2 or higher"
    assert gamma >= 0, "Gamma must be 0 or higher"
    if isinstance(gamma, float) and float(gamma).is_integer():
        gamma = int(gamma)              # integer_pow path instead of exp/log

    # Pure-metadata reshape (HW is contiguous): no HBM re-stream, no host cast.
    x = logits.reshape(N, C, HW)
    lbl = label.reshape(N, HW)
    # Stream labels at native narrow width; only convert if wide/non-integer.
    if (not jnp.issubdtype(lbl.dtype, jnp.integer)) or lbl.dtype.itemsize > 4:
        lbl = lbl.astype(jnp.int32)

    itemsize = logits.dtype.itemsize
    s_tile, s_rows_p, b_n, num_nb, n_sp, num_t = _tiling(
        N, C, HW, itemsize, lbl.dtype.itemsize, target_step_bytes)

    pad = s_rows_p * _LANES - HW
    needs_mask = pad != 0
    if needs_mask:
        # One streaming pad pass; only taken when HW isn't lane/block aligned.
        x = jnp.pad(x, ((0, 0), (0, 0), (0, pad)))
        lbl = jnp.pad(lbl, ((0, 0), (0, pad)))
    x = x.reshape(N, C, s_rows_p, _LANES)
    lbl = lbl.reshape(N, s_rows_p, _LANES)

    kernel = functools.partial(
        _focal_loss_kernel, num_classes=C, gamma=gamma, lb_smooth=lb_smooth,
        ignore_index=ignore_index, hw=HW, s_tile=s_tile, num_t=num_t,
        n_sp=n_sp, needs_mask=needs_mask)

    # Real VMEM footprint: double-buffered inputs + ~12 dense f32 temporaries
    # + the accumulator.  Cap the explicit limit at 48 MiB so it always fits
    # v7x's 64 MiB physical VMEM while overriding v5e's 16 MiB default scope.
    x_blk = b_n * C * s_tile * _LANES * itemsize
    l_blk = b_n * s_tile * _LANES * lbl.dtype.itemsize
    tmp = 12 * b_n * s_tile * _LANES * 4
    est = 2 * (x_blk + l_blk) + tmp + s_tile * _LANES * 4
    vmem_limit = int(min(max(2 * est, 32 << 20), 48 << 20))

    partials = pl.pallas_call(
        kernel,
        out_shape=jax.ShapeDtypeStruct((num_nb, n_sp, 1, 1), jnp.float32),
        grid_spec=pltpu.PrefetchScalarGridSpec(
            num_scalar_prefetch=0,
            grid=(num_nb, n_sp, num_t),
            in_specs=[
                # logits: (N, C, S_rows, 128) -> kernel sees (B_N, C, S_TILE, 128)
                pl.BlockSpec((b_n, C, s_tile, _LANES),
                             lambda nb, sp, t: (nb, 0, sp * num_t + t, 0)),
                # labels: (N, S_rows, 128) -> kernel sees (B_N, S_TILE, 128)
                pl.BlockSpec((b_n, s_tile, _LANES),
                             lambda nb, sp, t: (nb, sp * num_t + t, 0)),
            ],
            # one partial sum per (image-block, spatial-split) cell, resident
            # across the sequential t axis.
            out_specs=pl.BlockSpec((None, None, 1, 1),
                                   lambda nb, sp, t: (nb, sp, 0, 0)),
            scratch_shapes=[pltpu.VMEM((s_tile, _LANES), jnp.float32)],
        ),
        compiler_params=pltpu.CompilerParams(
            dimension_semantics=("parallel", "parallel", "arbitrary"),
            vmem_limit_bytes=vmem_limit),
    )(x, lbl)

    # .mean() over all N*H*W pixels (ignored pixels still count in the mean,
    # exactly like the PyTorch reference).
    return jnp.sum(partials) / (N * HW)


def _reference(logits, label, gamma=1, lb_smooth=0.1, ignore_index=None):
    """Pure-JAX reference mirroring the PyTorch module, for correctness check."""
    logits = logits.astype(jnp.float32)
    C = logits.shape[1]
    onehot = jax.nn.one_hot(label, C, axis=1)          # (N, C, H, W)
    p = jax.nn.softmax(logits, axis=1)
    diff = (1.0 - onehot * p) ** gamma
    lbl = label
    if ignore_index is not None:
        ignore = label == ignore_index
        lbl = jnp.where(ignore, 0, label)
    lb_pos = 1.0 - lb_smooth
    lb_neg = lb_smooth / (C - 1)
    lb_one_hot = jnp.where(jax.nn.one_hot(lbl, C, axis=1) > 0, lb_pos, lb_neg)
    logs = jax.nn.log_softmax(logits, axis=1)
    loss = -jnp.sum(diff * logs * lb_one_hot, axis=1)   # (N, H, W)
    if ignore_index is not None:
        loss = jnp.where(ignore, 0.0, loss)
    return loss.mean()


if __name__ == "__main__":
    key = jax.random.PRNGKey(0)
    k1, k2 = jax.random.split(key)

    N, C, H, W = 2, 4, 16, 16
    logits = jax.random.normal(k1, (N, C, H, W), dtype=jnp.float32)
    label = jax.random.randint(k2, (N, H, W), 0, C, dtype=jnp.int32)

    # Tolerance 1e-3: the approx reciprocal perturbs only the focal modulation
    # factor (~1e-4-level absolute effect on the mean loss); everything else is
    # exact f32.

    # plain case
    out = focal_loss_with_smoothing(logits, label, gamma=1, lb_smooth=0.1)
    out = jax.block_until_ready(out)
    ref = _reference(logits, label, gamma=1, lb_smooth=0.1)
    assert abs(float(out) - float(ref)) < 1e-3, (float(out), float(ref))

    # ignore_index case
    out_i = focal_loss_with_smoothing(logits, label, gamma=2, lb_smooth=0.1,
                                      ignore_index=2)
    out_i = jax.block_until_ready(out_i)
    ref_i = _reference(logits, label, gamma=2, lb_smooth=0.1, ignore_index=2)
    assert abs(float(out_i) - float(ref_i)) < 1e-3, (float(out_i), float(ref_i))

    # non-lane-aligned spatial size: exercises the padded-tail mask path
    H2, W2 = 12, 12
    logits2 = jax.random.normal(k1, (N, C, H2, W2), dtype=jnp.float32)
    label2 = jax.random.randint(k2, (N, H2, W2), 0, C, dtype=jnp.int32)
    out_p = focal_loss_with_smoothing(logits2, label2, gamma=2, lb_smooth=0.1)
    out_p = jax.block_until_ready(out_p)
    ref_p = _reference(logits2, label2, gamma=2, lb_smooth=0.1)
    assert abs(float(out_p) - float(ref_p)) < 1e-3, (float(out_p), float(ref_p))

    print("KERNEL_OK")
</pallas_src>

<mosaic_0001>
module attributes {stable_mosaic.version = 11 : i64} {
  func.func @_focal_loss_kernel(%arg0: i32, %arg1: i32, %arg2: i32, %arg3: memref<1x4x2x128xf32, #tpu.memory_space<vmem>>, %arg4: memref<1x2x128xi32, #tpu.memory_space<vmem>>, %arg5: memref<1x1x1x1xf32, #tpu.memory_space<vmem>>, %arg6: memref<2x128xf32, #tpu.memory_space<vmem>>) attributes {dimension_semantics = [#tpu.dimension_semantics<parallel>, #tpu.dimension_semantics<parallel>, #tpu.dimension_semantics<arbitrary>], iteration_bounds = array<i64: 2, 1, 1>, scalar_prefetch = 0 : i64, scratch_operands = 1 : i64, tpu.core_type = #tpu.core_type<tc>, window_params = [{transform_indices = @transform_0, window_bounds = array<i64: 1, 4, 2, 128>}, {transform_indices = @transform_1, window_bounds = array<i64: 1, 2, 128>}, {transform_indices = @transform_2, window_bounds = array<i64: 1, 1, 1, 1>}]} {
    %c0_i32 = arith.constant 0 : i32
    %0 = arith.cmpi eq, %arg2, %c0_i32 : i32
    %1 = arith.extui %0 : i1 to i32
    %c0_i32_0 = arith.constant 0 : i32
    %2 = arith.cmpi ne, %1, %c0_i32_0 : i32
    scf.if %2 {
      %cst_23 = arith.constant 0.000000e+00 : f32
      %86 = vector.broadcast %cst_23 : f32 to vector<2x128xf32>
      %c0_24 = arith.constant 0 : index
      %c0_25 = arith.constant 0 : index
      %87 = vector.load %arg6[%c0_24, %c0_25] : memref<2x128xf32, #tpu.memory_space<vmem>>, vector<2x128xf32>
      tpu.vector_store %arg6[%c0_24, %c0_25], %86 {strides = array<i32>} : memref<2x128xf32, #tpu.memory_space<vmem>>, vector<2x128xf32>,
    } else {
    }
    %c0 = arith.constant 0 : index
    %c0_1 = arith.constant 0 : index
    %c0_2 = arith.constant 0 : index
    %c0_3 = arith.constant 0 : index
    %3 = vector.load %arg3[%c0, %c0_1, %c0_2, %c0_3] : memref<1x4x2x128xf32, #tpu.memory_space<vmem>>, vector<1x4x2x128xf32>
    %c0_4 = arith.constant 0 : index
    %c0_5 = arith.constant 0 : index
    %c0_6 = arith.constant 0 : index
    %4 = vector.load %arg4[%c0_4, %c0_5, %c0_6] : memref<1x2x128xi32, #tpu.memory_space<vmem>>, vector<1x2x128xi32>
    %5 = vector.extract_strided_slice %3 {offsets = [0, 0, 0, 0], sizes = [1, 1, 2, 128], strides = [1, 1, 1, 1]} : vector<1x4x2x128xf32> to vector<1x1x2x128xf32>
    %6 = vector.shape_cast %5 : vector<1x1x2x128xf32> to vector<1x2x128xf32>
    %7 = vector.extract_strided_slice %3 {offsets = [0, 1, 0, 0], sizes = [1, 1, 2, 128], strides = [1, 1, 1, 1]} : vector<1x4x2x128xf32> to vector<1x1x2x128xf32>
    %8 = vector.shape_cast %7 : vector<1x1x2x128xf32> to vector<1x2x128xf32>
    %9 = arith.maximumf %6, %8 : vector<1x2x128xf32>
    %10 = arith.addf %6, %8 : vector<1x2x128xf32>
    %11 = vector.extract_strided_slice %3 {offsets = [0, 2, 0, 0], sizes = [1, 1, 2, 128], strides = [1, 1, 1, 1]} : vector<1x4x2x128xf32> to vector<1x1x2x128xf32>
    %12 = vector.shape_cast %11 : vector<1x1x2x128xf32> to vector<1x2x128xf32>
    %13 = arith.maximumf %9, %12 : vector<1x2x128xf32>
    %14 = arith.addf %10, %12 : vector<1x2x128xf32>
    %15 = vector.extract_strided_slice %3 {offsets = [0, 3, 0, 0], sizes = [1, 1, 2, 128], strides = [1, 1, 1, 1]} : vector<1x4x2x128xf32> to vector<1x1x2x128xf32>
    %16 = vector.shape_cast %15 : vector<1x1x2x128xf32> to vector<1x2x128xf32>
    %17 = arith.maximumf %13, %16 : vector<1x2x128xf32>
    %18 = arith.addf %14, %16 : vector<1x2x128xf32>
    %cst = arith.constant 0.000000e+00 : f32
    %19 = vector.broadcast %cst : f32 to vector<1x2x128xf32>
    %cst_7 = arith.constant 0.000000e+00 : f32
    %20 = vector.broadcast %cst_7 : f32 to vector<1x2x128xf32>
    %cst_8 = arith.constant 0.000000e+00 : f32
    %21 = vector.broadcast %cst_8 : f32 to vector<1x2x128xf32>
    %22 = vector.extract_strided_slice %3 {offsets = [0, 0, 0, 0], sizes = [1, 1, 2, 128], strides = [1, 1, 1, 1]} : vector<1x4x2x128xf32> to vector<1x1x2x128xf32>
    %23 = vector.shape_cast %22 : vector<1x1x2x128xf32> to vector<1x2x128xf32>
    %24 = arith.subf %23, %17 : vector<1x2x128xf32>
    %25 = math.exp %24 : vector<1x2x128xf32>
    %26 = arith.addf %19, %25 : vector<1x2x128xf32>
    %c0_i32_9 = arith.constant 0 : i32
    %27 = vector.broadcast %c0_i32_9 : i32 to vector<1x2x128xi32>
    %28 = arith.cmpi eq, %4, %27 : vector<1x2x128xi32>
    %29 = arith.select %28, %23, %20 : vector<1x2x128xi1>, vector<1x2x128xf32>
    %30 = arith.select %28, %25, %21 : vector<1x2x128xi1>, vector<1x2x128xf32>
    %31 = vector.extract_strided_slice %3 {offsets = [0, 1, 0, 0], sizes = [1, 1, 2, 128], strides = [1, 1, 1, 1]} : vector<1x4x2x128xf32> to vector<1x1x2x128xf32>
    %32 = vector.shape_cast %31 : vector<1x1x2x128xf32> to vector<1x2x128xf32>
    %33 = arith.subf %32, %17 : vector<1x2x128xf32>
    %34 = math.exp %33 : vector<1x2x128xf32>
    %35 = arith.addf %26, %34 : vector<1x2x128xf32>
    %c1_i32 = arith.constant 1 : i32
    %36 = vector.broadcast %c1_i32 : i32 to vector<1x2x128xi32>
    %37 = arith.cmpi eq, %4, %36 : vector<1x2x128xi32>
    %38 = arith.select %37, %32, %29 : vector<1x2x128xi1>, vector<1x2x128xf32>
    %39 = arith.select %37, %34, %30 : vector<1x2x128xi1>, vector<1x2x128xf32>
    %40 = vector.extract_strided_slice %3 {offsets = [0, 2, 0, 0], sizes = [1, 1, 2, 128], strides = [1, 1, 1, 1]} : vector<1x4x2x128xf32> to vector<1x1x2x128xf32>
    %41 = vector.shape_cast %40 : vector<1x1x2x128xf32> to vector<1x2x128xf32>
    %42 = arith.subf %41, %17 : vector<1x2x128xf32>
    %43 = math.exp %42 : vector<1x2x128xf32>
    %44 = arith.addf %35, %43 : vector<1x2x128xf32>
    %c2_i32 = arith.constant 2 : i32
    %45 = vector.broadcast %c2_i32 : i32 to vector<1x2x128xi32>
    %46 = arith.cmpi eq, %4, %45 : vector<1x2x128xi32>
    %47 = arith.select %46, %41, %38 : vector<1x2x128xi1>, vector<1x2x128xf32>
    %48 = arith.select %46, %43, %39 : vector<1x2x128xi1>, vector<1x2x128xf32>
    %49 = vector.extract_strided_slice %3 {offsets = [0, 3, 0, 0], sizes = [1, 1, 2, 128], strides = [1, 1, 1, 1]} : vector<1x4x2x128xf32> to vector<1x1x2x128xf32>
    %50 = vector.shape_cast %49 : vector<1x1x2x128xf32> to vector<1x2x128xf32>
    %51 = arith.subf %50, %17 : vector<1x2x128xf32>
    %52 = math.exp %51 : vector<1x2x128xf32>
    %53 = arith.addf %44, %52 : vector<1x2x128xf32>
    %c3_i32 = arith.constant 3 : i32
    %54 = vector.broadcast %c3_i32 : i32 to vector<1x2x128xi32>
    %55 = arith.cmpi eq, %4, %54 : vector<1x2x128xi32>
    %56 = arith.select %55, %50, %47 : vector<1x2x128xi1>, vector<1x2x128xf32>
    %57 = arith.select %55, %52, %48 : vector<1x2x128xi1>, vector<1x2x128xf32>
    %58 = math.log %53 : vector<1x2x128xf32>
    %59 = arith.addf %17, %58 : vector<1x2x128xf32>
    %60 = arith.subf %56, %59 : vector<1x2x128xf32>
    %cst_10 = arith.constant 4.000000e+00 : f32
    %61 = vector.broadcast %cst_10 : f32 to vector<1x2x128xf32>
    %62 = arith.mulf %61, %59 : vector<1x2x128xf32>
    %63 = arith.subf %18, %62 : vector<1x2x128xf32>
    %64 = tpu.reciprocal %53 {approx = true} : vector<1x2x128xf32> -> vector<1x2x128xf32>
    %65 = arith.mulf %57, %64 : vector<1x2x128xf32>
    %cst_11 = arith.constant 1.000000e+00 : f32
    %66 = vector.broadcast %cst_11 : f32 to vector<1x2x128xf32>
    %67 = arith.subf %66, %65 : vector<1x2x128xf32>
    %cst_12 = arith.constant 0.000000e+00 : f32
    %68 = vector.broadcast %cst_12 : f32 to vector<1x2x128xf32>
    %69 = arith.maximumf %67, %68 : vector<1x2x128xf32>
    %70 = arith.subf %63, %60 : vector<1x2x128xf32>
    %cst_13 = arith.constant 0.0333333351 : f32
    %71 = vector.broadcast %cst_13 : f32 to vector<1x2x128xf32>
    %72 = arith.mulf %71, %70 : vector<1x2x128xf32>
    %cst_14 = arith.constant 0.899999976 : f32
    %73 = vector.broadcast %cst_14 : f32 to vector<1x2x128xf32>
    %74 = arith.mulf %73, %69 : vector<1x2x128xf32>
    %75 = arith.mulf %74, %60 : vector<1x2x128xf32>
    %76 = arith.addf %72, %75 : vector<1x2x128xf32>
    %cst_15 = arith.constant 0.000000e+00 : f32
    %77 = vector.broadcast %cst_15 : f32 to vector<1x2x128xf32>
    %78 = arith.subf %77, %76 : vector<1x2x128xf32>
    %cst_16 = arith.constant dense<0.000000e+00> : vector<2x128xf32>
    %79 = vector.multi_reduction <add>, %78, %cst_16 [0] : vector<1x2x128xf32> to vector<2x128xf32>
    %c0_17 = arith.constant 0 : index
    %c0_18 = arith.constant 0 : index
    %80 = vector.load %arg6[%c0_17, %c0_18] : memref<2x128xf32, #tpu.memory_space<vmem>>, vector<2x128xf32>
    %81 = arith.addf %80, %79 : vector<2x128xf32>
    %c0_19 = arith.constant 0 : index
    %c0_20 = arith.constant 0 : index
    %82 = vector.load %arg6[%c0_19, %c0_20] : memref<2x128xf32, #tpu.memory_space<vmem>>, vector<2x128xf32>
    tpu.vector_store %arg6[%c0_19, %c0_20], %81 {strides = array<i32>} : memref<2x128xf32, #tpu.memory_space<vmem>>, vector<2x128xf32>,
    %c0_i32_21 = arith.constant 0 : i32
    %83 = arith.cmpi eq, %arg2, %c0_i32_21 : i32
    %84 = arith.extui %83 : i1 to i32
    %c0_i32_22 = arith.constant 0 : i32
    %85 = arith.cmpi ne, %84, %c0_i32_22 : i32
    scf.if %85 {
      %c0_23 = arith.constant 0 : index
      %c0_24 = arith.constant 0 : index
      %86 = vector.load %arg6[%c0_23, %c0_24] : memref<2x128xf32, #tpu.memory_space<vmem>>, vector<2x128xf32>
      %cst_25 = arith.constant dense<0.000000e+00> : vector<128xf32>
      %87 = vector.multi_reduction <add>, %86, %cst_25 [0] : vector<2x128xf32> to vector<128xf32>
      %88 = vector.shape_cast %87 : vector<128xf32> to vector<1x128xf32>
      %cst_26 = arith.constant dense<0.000000e+00> : vector<1xf32>
      %89 = vector.multi_reduction <add>, %88, %cst_26 [1] : vector<1x128xf32> to vector<1xf32>
      %90 = vector.shape_cast %89 : vector<1xf32> to vector<1x1xf32>
      %c0_27 = arith.constant 0 : index
      %c0_28 = arith.constant 0 : index
      %c0_29 = arith.constant 0 : index
      %c0_30 = arith.constant 0 : index
      %91 = vector.load %arg5[%c0_27, %c0_28, %c0_29, %c0_30] : memref<1x1x1x1xf32, #tpu.memory_space<vmem>>, vector<1x1x1x1xf32>
      %92 = vector.shape_cast %91 : vector<1x1x1x1xf32> to vector<1x1xf32>
      %93 = vector.shape_cast %90 : vector<1x1xf32> to vector<1x1x1x1xf32>
      tpu.vector_store %arg5[%c0_27, %c0_28, %c0_29, %c0_30], %93 {strides = array<i32>} : memref<1x1x1x1xf32, #tpu.memory_space<vmem>>, vector<1x1x1x1xf32>,
    } else {
    }
    return
  }
  func.func @transform_0(%arg0: i32, %arg1: i32, %arg2: i32) -> (i32, i32, i32, i32) {
    %c1_i32 = arith.constant 1 : i32
    %0 = arith.muli %arg1, %c1_i32 : i32
    %1 = arith.addi %0, %arg2 : i32
    %c0_i32 = arith.constant 0 : i32
    %c0_i32_0 = arith.constant 0 : i32
    %c0_i32_1 = arith.constant 0 : i32
    return %arg0, %c0_i32, %1, %c0_i32_0 : i32, i32, i32, i32
  }
  func.func @transform_1(%arg0: i32, %arg1: i32, %arg2: i32) -> (i32, i32, i32) {
    %c1_i32 = arith.constant 1 : i32
    %0 = arith.muli %arg1, %c1_i32 : i32
    %1 = arith.addi %0, %arg2 : i32
    %c0_i32 = arith.constant 0 : i32
    %c0_i32_0 = arith.constant 0 : i32
    return %arg0, %1, %c0_i32 : i32, i32, i32
  }
  func.func @transform_2(%arg0: i32, %arg1: i32, %arg2: i32) -> (i32, i32, i32, i32) {
    %c0_i32 = arith.constant 0 : i32
    %c0_i32_0 = arith.constant 0 : i32
    %c0_i32_1 = arith.constant 0 : i32
    return %arg0, %arg1, %c0_i32, %c0_i32_0 : i32, i32, i32, i32
  }
}

</mosaic_0001>

<llo_original>
// kernel: tpu_custom_call.1
$region0: #{tpu_custom_call.1}
  #allocation0 [shape = 'u32[]', space=smem, size = 0x4, offset = 0x4, fixed_abs, tag = 'smem constant byte address 0x4 - core index']
  #allocation1 [shape = 'u32[144,128]{1,0:T(1,128)}', space=vmem, size = 0x12000, scoped, tag = 'internal scratch']
  #allocation2 [shape = 'f32[2,128]{1,0:T(2,128)}', space=vmem, size = 0x400, scoped, tag = 'scratch operand']
  %s0 = inlined_call_operand.hbm [shape: f32[2,4,2,128], index: 0, kind: input, shape index: {}]
  %s1 = inlined_call_operand.hbm [shape: s32[2,2,128], index: 1, kind: input, shape index: {}]
  %s2 = inlined_call_operand.vmem [shape: f32[2,1,1,1], index: 2, kind: output, shape index: {}]
  %s3 = sld [smem:[#allocation0]]
  $region57: #{tpu_custom_call.1} parent=0
    _
  %s5 = ssub.s32 1, %s3
  %s6 = scalar_select 0, %s5, %s3
  $region1: #{tpu_custom_call.1} parent=0
    #allocation3 [shape = 'u8[8192]{0}', space=vmem, size = 0x2000, scoped, tag = 'input window, operand 0']
    #allocation4 [shape = 's32[2]{0}', space=sflag, size = 0x8, scoped, tag = 'scoped memory for tpu_custom_call.1']
    #allocation5 [shape = 'u8[2048]{0}', space=vmem, size = 0x800, scoped, tag = 'input window, operand 1']
    #allocation6 [shape = 's32[2]{0}', space=sflag, size = 0x8, scoped, tag = 'scoped memory for tpu_custom_call.1']
    %7 = vsyncpa [#allocation4], 0
    %s8 = scalar_lea.sflag [#allocation4], 1
    %9 = vsyncpa %s8, 0
    %10 = vsyncpa [#allocation6], 0
    %s11 = scalar_lea.sflag [#allocation6], 1
    %12 = vsyncpa %s11, 0
    loop: start=0, step=1, limit=4
    $region2: #{tpu_custom_call.1} parent=1 // loop_pre_header
      _
    $region3: #{tpu_custom_call.1} parent=1 // loop_header
      %s14 = sphi 0, %s18
      %p15 = scmp.ge.s32.totalorder %s14, 4
      %s21 = sphi 0, %s40
      %s22 = sphi 0, %s36
      %s23 = sphi 0, %s32
      %s24 = sphi 0, %s21
      %s25 = sphi 0, %s22
      %s26 = sphi 0, %s23
      %s27 = sphi 0, %s24
      %s28 = sphi 0, %s25
      %s29 = sphi 0, %s26
      %s47 = sphi 0, %s49
      %s50 = sphi 0, %s47
      %s51 = sphi 0, %s50
      %s67 = sphi 0, %s51
      %s77 = sphi 0, %s79
      %s80 = sphi 0, %s77
      %s81 = sphi 0, %s80
      %s97 = sphi 0, %s81
      %s105 = sphi 0, %s107
      %s108 = sphi 0, %s105
      %s109 = sphi 0, %s108
      %s125 = sphi 0, %s109
    $region4: #{tpu_custom_call.1} parent=1 // loop_header_branch
      %17 = sbr.rel (%p15) target = $region8
    $region5: #{tpu_custom_call.1} parent=1 // loop_body
      %s19 = ssub.s32 %s14, 1
      %s20 = ssub.s32 %s14, 2
      %s30 = sadd.s32 1, %s23
      %p31 = scmp.ge.s32.totalorder %s30, 1
      %s32 = scalar_select %p31, 0, %s30
      %s33 = sadd.s32 1, %s22
      %s34 = scalar_select %p31, %s33, %s22
      %p35 = scmp.ge.s32.totalorder %s34, 1
      %s36 = scalar_select %p35, 0, %s34
      %s37 = sadd.s32 1, %s21
      %s38 = scalar_select %p35, %s37, %s21
      %p39 = scmp.ge.s32.totalorder %s38, 2
      %s40 = scalar_select %p39, 0, %s38
      %s41 = sadd.s32 %s22, %s23
      %s42 = sadd.s32 %s36, %s32
      %s43 = ssub.s32 %s21, %s40
      %s44 = ssub.s32 %s41, %s42
      %s45 = sor.u32 %s43, %s44
      %p46 = scmp.eq.s32.totalorder %s45, 0
      %s48 = sadd.s32 %s47, 1
      %s49 = scalar_select %p46, %s47, %s48
      %p52 = pneg %p46
      %p53 = scmp.eq.s32.totalorder %s14, 1
      %p54 = por %p52, %p53
      %p55 = scmp.ne.s32.totalorder %s47, %s50
      %p56 = scmp.eq.s32.totalorder %s14, 0
      %p57 = por %p55, %p56
      %p58 = scmp.ne.s32.totalorder %s47, %s50
      %p59 = scmp.eq.s32.totalorder %s19, 1
      %p60 = por %p58, %p59
      %p61 = scmp.ne.s32.totalorder %s50, %s51
      %p62 = scmp.eq.s32.totalorder %s19, 0
      %p63 = por %p61, %p62
      %p64 = scmp.ne.s32.totalorder %s50, %s51
      %p65 = scmp.eq.s32.totalorder %s20, 1
      %p66 = por %p64, %p65
      %p68 = scmp.ne.s32.totalorder %s51, %s67
      %p69 = scmp.eq.s32.totalorder %s20, 0
      %p70 = por %p68, %p69
      %s71 = sadd.s32 %s22, %s23
      %s72 = sadd.s32 %s36, %s32
      %s73 = ssub.s32 %s21, %s40
      %s74 = ssub.s32 %s71, %s72
      %s75 = sor.u32 %s73, %s74
      %p76 = scmp.eq.s32.totalorder %s75, 0
      %s78 = sadd.s32 %s77, 1
      %s79 = scalar_select %p76, %s77, %s78
      %p82 = pneg %p76
      %p83 = scmp.eq.s32.totalorder %s14, 1
      %p84 = por %p82, %p83
      %p85 = scmp.ne.s32.totalorder %s77, %s80
      %p86 = scmp.eq.s32.totalorder %s14, 0
      %p87 = por %p85, %p86
      %p88 = scmp.ne.s32.totalorder %s77, %s80
      %p89 = scmp.eq.s32.totalorder %s19, 1
      %p90 = por %p88, %p89
      %p91 = scmp.ne.s32.totalorder %s80, %s81
      %p92 = scmp.eq.s32.totalorder %s19, 0
      %p93 = por %p91, %p92
      %p94 = scmp.ne.s32.totalorder %s80, %s81
      %p95 = scmp.eq.s32.totalorder %s20, 1
      %p96 = por %p94, %p95
      %p98 = scmp.ne.s32.totalorder %s81, %s97
      %p99 = scmp.eq.s32.totalorder %s20, 0
      %p100 = por %p98, %p99
      %s101 = ssub.s32 %s21, %s40
      %s102 = ssub.s32 %s22, %s36
      %s103 = sor.u32 %s101, %s102
      %p104 = scmp.eq.s32.totalorder %s103, 0
      %s106 = sadd.s32 %s105, 1
      %s107 = scalar_select %p104, %s105, %s106
      %p110 = pneg %p104
      %p111 = scmp.eq.s32.totalorder %s14, 1
      %p112 = por %p110, %p111
      %p113 = scmp.ne.s32.totalorder %s105, %s108
      %p114 = scmp.eq.s32.totalorder %s14, 0
      %p115 = por %p113, %p114
      %p116 = scmp.ne.s32.totalorder %s105, %s108
      %p117 = scmp.eq.s32.totalorder %s19, 1
      %p118 = por %p116, %p117
      %p119 = scmp.ne.s32.totalorder %s108, %s109
      %p120 = scmp.eq.s32.totalorder %s19, 0
      %p121 = por %p119, %p120
      %p122 = scmp.ne.s32.totalorder %s108, %s109
      %p123 = scmp.eq.s32.totalorder %s20, 1
      %p124 = por %p122, %p123
      %p126 = scmp.ne.s32.totalorder %s109, %s125
      %p127 = scmp.eq.s32.totalorder %s20, 0
      %p128 = por %p126, %p127
      %p129 = scmp.le.s32.totalorder 1, %s14
      %p130 = scmp.lt.s32.totalorder %s14, 3
      %p131 = pnand %p129, %p130
      %p132 = pneg %p131
      // Predicated region
      $region9: #{tpu_custom_call.1} parent=5 // pred_check
        _
      $region10: #{tpu_custom_call.1} parent=5 // pred_check_branch
        %134 = sbr.rel (%p131) target = $region12
      $region11: #{tpu_custom_call.1} parent=5 // pred_region
        %s135 = ssub.s32 %s14, 1
      $region12: #{tpu_custom_call.1} parent=5 // pred_fallthru
        _
      %p136 = scmp.lt.s32.totalorder %s14, 2
      // Predicated region
      $region13: #{tpu_custom_call.1} parent=5 // pred_check
        %p137 = pneg %p136
      $region14: #{tpu_custom_call.1} parent=5 // pred_check_branch
        %139 = sbr.rel (%p137) target = $region16
      $region15: #{tpu_custom_call.1} parent=5 // pred_region
        // Predicated region
        $region17: #{tpu_custom_call.1} parent=15 // pred_check
          %p140 = pneg %p57
        $region18: #{tpu_custom_call.1} parent=15 // pred_check_branch
          %142 = sbr.rel (%p140) target = $region20
        $region19: #{tpu_custom_call.1} parent=15 // pred_region
          %s143 = sand.u32 %s47, 1
          %s144 = scalar_lea.sflag [#allocation4], %s143
          %s145 = sand.u32 %s47, 1
          %s146 = smul.addr %s145, 8
          %s147 = scalar_lea.vmem [#allocation3], %s146
          %s148 = sadd.s32 %s22, %s23
          %s150 = ssub.s32 128, 128
          %151 = vsyncadd %s144, %s150
          %s152 = smul.addr %s21, 4
          %s153 = sadd.s32 %s148, %s152
          %s154 = smul.addr %s153, 32
          %s155 = scalar_lea.hbm %s0, %s154
          %s156 = sshll.u32 %s147, 4
          %s157 = int_to_ptr.vmem [resolvable:$true] %s156
          %162 = dma.hbm_to_vmem [thread:$0]  %s155, 128, %s157, %s144, 32, 32, 2
        $region20: #{tpu_custom_call.1} parent=15 // pred_fallthru
          _
        // Predicated region
        $region21: #{tpu_custom_call.1} parent=15 // pred_check
          %p163 = pneg %p87
        $region22: #{tpu_custom_call.1} parent=15 // pred_check_branch
          %165 = sbr.rel (%p163) target = $region24
        $region23: #{tpu_custom_call.1} parent=15 // pred_region
          %s166 = sand.u32 %s77, 1
          %s167 = scalar_lea.sflag [#allocation6], %s166
          %s168 = sand.u32 %s77, 1
          %s169 = smul.addr %s168, 2
          %s170 = scalar_lea.vmem [#allocation5], %s169
          %s171 = sadd.s32 %s22, %s23
          %s173 = ssub.s32 32, 32
          %174 = vsyncadd %s167, %s173
          %s175 = sadd.s32 %s171, %s21
          %s176 = smul.addr %s175, 32
          %s177 = scalar_lea.hbm %s1, %s176
          %s179 = sshll.u32 %s170, 4
          %s180 = int_to_ptr.vmem [resolvable:$true] %s179
          %182 = dma.hbm_to_vmem [thread:$0]  %s177, 32, %s180, %s167
        $region24: #{tpu_custom_call.1} parent=15 // pred_fallthru
          _
      $region16: #{tpu_custom_call.1} parent=5 // pred_fallthru
        _
      %p183 = scmp.le.s32.totalorder 1, %s14
      %p184 = scmp.lt.s32.totalorder %s14, 3
      %p185 = pnand %p183, %p184
      %p186 = pneg %p185
      // Predicated region
      $region25: #{tpu_custom_call.1} parent=5 // pred_check
        _
      $region26: #{tpu_custom_call.1} parent=5 // pred_check_branch
        %188 = sbr.rel (%p185) target = $region28
      $region27: #{tpu_custom_call.1} parent=5 // pred_region
        %s189 = ssub.s32 %s14, 1
        %s190 = sand.u32 %s50, 1
        %s191 = scalar_lea.sflag [#allocation4], %s190
        %s192 = sand.u32 %s50, 1
        %s193 = smul.addr %s192, 8
        %s194 = scalar_lea.vmem [#allocation3], %s193
        // Predicated region
        $region29: #{tpu_custom_call.1} parent=27 // pred_check
          %p195 = pneg %p63
        $region30: #{tpu_custom_call.1} parent=27 // pred_check_branch
          %197 = sbr.rel (%p195) target = $region32
        $region31: #{tpu_custom_call.1} parent=27 // pred_region
          %198 = dma.done %s191, 128
        $region32: #{tpu_custom_call.1} parent=27 // pred_fallthru
          _
        %s199 = sand.u32 %s80, 1
        %s200 = scalar_lea.sflag [#allocation6], %s199
        %s201 = sand.u32 %s80, 1
        %s202 = smul.addr %s201, 2
        %s203 = scalar_lea.vmem [#allocation5], %s202
        // Predicated region
        $region33: #{tpu_custom_call.1} parent=27 // pred_check
          %p204 = pneg %p93
        $region34: #{tpu_custom_call.1} parent=27 // pred_check_branch
          %206 = sbr.rel (%p204) target = $region36
        $region35: #{tpu_custom_call.1} parent=27 // pred_region
          %207 = dma.done %s200, 32
        $region36: #{tpu_custom_call.1} parent=27 // pred_fallthru
          _
        %s208 = sand.u32 %s50, 1
        %s209 = scalar_lea.sflag [#allocation4], %s208
        %s210 = sand.u32 %s50, 1
        %s211 = smul.addr %s210, 8
        %s212 = scalar_lea.vmem [#allocation3], %s211
        %p213 = pneg %p63
        %p214 = pneg %p60
        %s215 = sand.u32 %s80, 1
        %s216 = scalar_lea.sflag [#allocation6], %s215
        %s217 = sand.u32 %s80, 1
        %s218 = smul.addr %s217, 2
        %s219 = scalar_lea.vmem [#allocation5], %s218
        %p220 = pneg %p93
        %p221 = pneg %p90
        %p222 = pneg %p121
        %p223 = pneg %p118
        %p224 = scmp.lt.s32.totalorder %s24, 1
        %s225 = scalar_select %p224, %s24, 1
        %p226 = scmp.lt.s32.totalorder %s25, 0
        %s227 = scalar_select %p226, %s25, 0
        %s228 = sadd.s32 %s227, %s225
        %s229 = scalar_lea.vmem %s2, %s228
        %s230 = sadd.s32 %s25, %s26
        %s231 = sadd.s32 %s25, %s26
        %p232 = scmp.lt.s32.totalorder %s24, 1
        %s233 = scalar_select %p232, %s24, 1
        %p234 = scmp.lt.s32.totalorder %s25, 0
        %s235 = scalar_select %p234, %s25, 0
        %s236 = sadd.s32 %s235, %s233
        %s237 = scalar_lea.vmem %s2, %s236
        %p238 = scmp.eq.s32.totalorder %s26, 0
        // Predicated region
        $region37: #{tpu_custom_call.1} parent=27 // pred_check
          %p239 = pneg %p238
        $region38: #{tpu_custom_call.1} parent=27 // pred_check_branch
          %241 = sbr.rel (%p239) target = $region40
        $region39: #{tpu_custom_call.1} parent=27 // pred_region
          %242 = vst [vmem:[#allocation2] sm:$0x3] 0.0
        $region40: #{tpu_custom_call.1} parent=27 // pred_fallthru
          _
        %v243 = vld [vmem:[%s194] sm:$0x3]
        %v244 = vld [vmem:[%s194 + $0x2] sm:$0x3]
        %v245 = vld [vmem:[%s194 + $0x4] sm:$0x3]
        %v246 = vld [vmem:[%s194 + $0x6] sm:$0x3]
        %v247 = vld [vmem:[%s203] sm:$0x3]
        %v248 = vmax.f32 %v243, %v244
        %v249 = vadd.f32 %v243, %v244
        %v250 = vmax.f32 %v248, %v245
        %v251 = vadd.f32 %v249, %v245
        %v252 = vmax.f32 %v250, %v246
        %v253 = vadd.f32 %v251, %v246
        %v254 = vsub.f32 %v243, %v252
        %v255 = vmul.f32 %v254, 1.442695
        %v256 = vpow.pop %v255
        %v257 = vadd.f32 %v256, 0.0
        %vm258 = vcmp.eq.s32.totalorder %v247, 0
        %v259 = vsel %vm258, %v243, 0.0
        %v260 = vsel %vm258, %v256, 0.0
        %v261 = vsub.f32 %v244, %v252
        %v262 = vmul.f32 %v261, 1.442695
        %v263 = vpow.pop %v262
        %v264 = vadd.f32 %v257, %v263
        %vm265 = vcmp.eq.s32.totalorder %v247, 1
        %v266 = vsel %vm265, %v244, %v259
        %v267 = vsel %vm265, %v263, %v260
        %v268 = vsub.f32 %v245, %v252
        %v269 = vmul.f32 %v268, 1.442695
        %v270 = vpow.pop %v269
        %v271 = vadd.f32 %v264, %v270
        %vm272 = vcmp.eq.s32.totalorder %v247, 2
        %v273 = vsel %vm272, %v245, %v266
        %v274 = vsel %vm272, %v270, %v267
        %v275 = vsub.f32 %v246, %v252
        %v276 = vmul.f32 %v275, 1.442695
        %v277 = vpow.pop %v276
        %v278 = vadd.f32 %v271, %v277
        %vm279 = vcmp.eq.s32.totalorder %v247, 3
        %v280 = vsel %vm279, %v246, %v273
        %v281 = vsel %vm279, %v277, %v274
        %v282 = vlog2.pop %v278
        %v283 = vmul.f32 %v282, 0.6931472
        %v284 = vadd.f32 %v252, %v283
        %v285 = vsub.f32 %v280, %v284
        %v286 = vmul.f32 %v284, 4.0
        %v287 = vsub.f32 %v253, %v286
        %v288 = vrcp.pop %v278
        %v289 = vmul.f32 %v281, %v288
        %v290 = vsub.f32 1.0, %v289
        %v291 = vmax.f32 %v290, 0.0
        %v292 = vsub.f32 %v287, %v285
        %v293 = vmul.f32 %v292, 0.033333335
        %v294 = vmul.f32 %v291, 0.9
        %v295 = vmul.f32 %v294, %v285
        %v296 = vadd.f32 %v293, %v295
        %v297 = vsub.f32 0.0, %v296
        %v298 = vadd.f32 %v297, 0.0
        %v299 = vld [vmem:[#allocation2] sm:$0x3]
        %v300 = vadd.f32 %v299, %v298
        %301 = vst [vmem:[#allocation2] sm:$0x3] %v300
        // Predicated region
        $region41: #{tpu_custom_call.1} parent=27 // pred_check
          %p302 = pneg %p238
        $region42: #{tpu_custom_call.1} parent=27 // pred_check_branch
          %304 = sbr.rel (%p302) target = $region44
        $region43: #{tpu_custom_call.1} parent=27 // pred_region
          %v305 = vld [vmem:[#allocation2] sm:$0x3]
          %vm306 = vcmask 1041408
          %v307 = vsel %vm306, %v305, 0.0
          %v308 = vrot.slane %v307, 4
          %v309 = vadd.f32 %v307, %v308
          %v310 = vrot.slane %v309, 2
          %v311 = vadd.f32 %v309, %v310
          %v312 = vrot.slane %v311, 1
          %v313 = vadd.f32 %v311, %v312
          %314 = vadd.xlane.f32.xlu0 %v313
          %v315 = vpop.xlane.xlu0 %314
          %vm316 = vcmask 0
          %317 = vst.msk [vmem:[%s237] sm:$0x1] %vm316, %v315
        $region44: #{tpu_custom_call.1} parent=27 // pred_fallthru
          _
        %p318 = scmp.lt.s32.totalorder %s24, 1
        %s319 = scalar_select %p318, %s24, 1
        %p320 = scmp.lt.s32.totalorder %s25, 0
        %s321 = scalar_select %p320, %s25, 0
        %s322 = sadd.s32 %s321, %s319
        %s323 = scalar_lea.vmem %s2, %s322
        // Predicated region
        $region45: #{tpu_custom_call.1} parent=27 // pred_check
          %p324 = pneg %p118
        $region46: #{tpu_custom_call.1} parent=27 // pred_check_branch
          %326 = sbr.rel (%p324) target = $region48
        $region47: #{tpu_custom_call.1} parent=27 // pred_region
          _
        $region48: #{tpu_custom_call.1} parent=27 // pred_fallthru
          _
      $region28: #{tpu_custom_call.1} parent=5 // pred_fallthru
        _
      %p327 = scmp.le.s32.totalorder 2, %s14
      // Predicated region
      $region49: #{tpu_custom_call.1} parent=5 // pred_check
        %p328 = pneg %p327
      $region50: #{tpu_custom_call.1} parent=5 // pred_check_branch
        %330 = sbr.rel (%p328) target = $region52
      $region51: #{tpu_custom_call.1} parent=5 // pred_region
        %s331 = ssub.s32 %s14, 2
        // Predicated region
        $region53: #{tpu_custom_call.1} parent=51 // pred_check
          %p332 = pneg %p124
        $region54: #{tpu_custom_call.1} parent=51 // pred_check_branch
          %334 = sbr.rel (%p332) target = $region56
        $region55: #{tpu_custom_call.1} parent=51 // pred_region
          %p335 = scmp.lt.s32.totalorder %s27, 1
          %s336 = scalar_select %p335, %s27, 1
          %p337 = scmp.lt.s32.totalorder %s28, 0
          %s338 = scalar_select %p337, %s28, 0
          %s339 = sadd.s32 %s338, %s336
          %s340 = scalar_lea.vmem %s2, %s339
        $region56: #{tpu_custom_call.1} parent=51 // pred_fallthru
          _
      $region52: #{tpu_custom_call.1} parent=5 // pred_fallthru
        _
    $region6: #{tpu_custom_call.1} parent=1 // loop_footer
      %s18 = sadd.s32 1, %s14
    $region7: #{tpu_custom_call.1} parent=1 // loop_footer_branch
      %13 = sbr.rel target = $region3
    $region8: #{tpu_custom_call.1} parent=1 // loop_exit
      _
    %341 = vsyncpa [#allocation4], 1
    %s342 = scalar_lea.sflag [#allocation4], 1
    %343 = vsyncpa %s342, 1
    %344 = vsyncpa [#allocation6], 1
    %s345 = scalar_lea.sflag [#allocation6], 1
    %346 = vsyncpa %s345, 1

</llo_original>
